<compile_context>
chip_gen: v7x
topology: tpu7x:2x2x1
jax: 0.10.0
libtpu: 0.0.40
codegen_flags: <defaults>
</compile_context>

<pallas_src>
import functools

import jax
import jax.numpy as jnp
from jax.experimental import pallas as pl
from jax.experimental.pallas import tpu as pltpu


def _lr_pad_kernel(x_ref, o_ref, *, padding, width):
    p = padding
    # Bulk copy at lane offset p (XLU rotate + shifted store; hidden while
    # the kernel is HBM-DMA bound).
    o_ref[:, :, p:p + width] = x_ref[...]
    # Two p-wide wrap columns.
    o_ref[:, :, :p] = x_ref[:, :, width - p:]
    o_ref[:, :, p + width:] = x_ref[:, :, :p]


def _tpu_vmem_info():
    """(vmem_capacity_bytes, has_two_tensorcores) with safe fallbacks."""
    try:
        cap = int(pltpu.get_tpu_info().vmem_capacity_bytes)
    except Exception:
        cap = 64 * 1024 * 1024  # conservative (v7x-sized) fallback
    # Heuristic: v7x exposes ~64 MiB VMEM per TensorCore and has 2 TCs/chip;
    # v5e / v6e expose 128 MiB with a single TC.
    two_tc = cap <= 96 * 1024 * 1024
    return cap, two_tc


def lr_pad(x, padding: int = 1, *, vmem_budget_bytes=None):
    """Circular (left/right) padding along the last axis of an NCHW tensor."""
    N, C, H, W = x.shape
    assert 0 <= padding <= W, f"padding must be in [0, W={W}], got {padding}"
    if padding == 0:
        return x

    NC = N * C
    out_w = W + 2 * padding
    dsize = jnp.dtype(x.dtype).itemsize

    vmem_cap, two_tc = _tpu_vmem_info()
    if vmem_budget_bytes is None:
        # Total double-buffered (in + out) budget per grid step.
        budget = min(int(vmem_cap * 0.625), 64 * 1024 * 1024)
    else:
        budget = int(vmem_budget_bytes)

    # Collapse N and C so one grid step moves a large contiguous slab.
    x2 = x.reshape(NC, H, W)
    kernel = functools.partial(_lr_pad_kernel, padding=padding, width=W)
    bytes_accessed = (NC * H * W + NC * H * out_w) * dsize

    # Double-buffered in+out bytes for one (1, H, W) row of the fused NC axis.
    bytes_per_row = 2 * H * (W + out_w) * dsize

    if bytes_per_row <= budget:
        # --- Case A: tile over the fused NC axis only. ---
        r_tile = max(1, budget // bytes_per_row)
        if two_tc and NC >= 2:
            half = (NC + 1) // 2
            # Only keep >= 2 grid steps (for megacore sharding) if the halved
            # block is still MiB-scale; otherwise per-step overhead dominates.
            if half * bytes_per_row >= (1 << 20):
                r_tile = min(r_tile, half)
        r_tile = min(r_tile, NC)
        grid = (pl.cdiv(NC, r_tile),)  # trailing partial block is masked
        in_specs = [pl.BlockSpec((r_tile, H, W), lambda i: (i, 0, 0))]
        out_specs = pl.BlockSpec((r_tile, H, out_w), lambda i: (i, 0, 0))
        dims = ("parallel",)
        actual_bytes = 2 * r_tile * H * (W + out_w) * dsize
    else:
        # --- Case B: a single (1, H, W) slab is too big; also tile H. ---
        bytes_per_h_row = 2 * (W + out_w) * dsize
        h_tile = max(1, budget // bytes_per_h_row)
        h_tile = (h_tile // 8) * 8          # keep sublane-aligned tiles
        if h_tile < 8:
            h_tile = 8                      # minimum legal sublane tile
        h_tile = min(h_tile, H)             # if H < 8, use the full dim
        grid = (NC, pl.cdiv(H, h_tile))
        in_specs = [pl.BlockSpec((1, h_tile, W), lambda i, h: (i, h, 0))]
        out_specs = pl.BlockSpec((1, h_tile, out_w), lambda i, h: (i, h, 0))
        dims = ("parallel", "parallel")
        actual_bytes = 2 * h_tile * (W + out_w) * dsize

    # Scoped VMEM limit: actual pipelined buffers + ~30% headroom, never below
    # the 32 MiB default and never above physical capacity.
    vmem_limit = min(vmem_cap, max(int(actual_bytes * 1.3), 32 * 1024 * 1024))

    out = pl.pallas_call(
        kernel,
        out_shape=jax.ShapeDtypeStruct((NC, H, out_w), x.dtype),
        grid_spec=pltpu.PrefetchScalarGridSpec(
            num_scalar_prefetch=0,
            grid=grid,
            in_specs=in_specs,
            out_specs=out_specs,
        ),
        compiler_params=pltpu.CompilerParams(
            dimension_semantics=dims,
            vmem_limit_bytes=vmem_limit,
        ),
        cost_estimate=pl.CostEstimate(
            flops=0, transcendentals=0, bytes_accessed=bytes_accessed),
    )(x2)

    return out.reshape(N, C, H, out_w)


def lr_pad_ref(x, padding: int = 1):
    # Pure-JAX reference mirroring the PyTorch lr_pad.
    if padding == 0:
        return x
    return jnp.concatenate([x[..., -padding:], x, x[..., :padding]], axis=3)


if __name__ == "__main__":
    key = jax.random.PRNGKey(0)
    N, C, H, W = 2, 4, 16, 16
    x = jax.random.normal(key, (N, C, H, W), dtype=jnp.float32)

    # 1) padding = 1 (module default), default (generation-aware) tiling.
    out = jax.block_until_ready(lr_pad(x, 1))
    ref = lr_pad_ref(x, 1)
    assert out.shape == (N, C, H, W + 2), out.shape
    assert out.dtype == x.dtype
    assert jnp.array_equal(out, ref), "mismatch vs reference (padding=1)"

    # 2) wider padding, bf16.
    xb = x.astype(jnp.bfloat16)
    out2 = jax.block_until_ready(lr_pad(xb, 2))
    ref2 = lr_pad_ref(xb, 2)
    assert out2.shape == (N, C, H, W + 4)
    assert jnp.array_equal(out2, ref2), "mismatch vs reference (padding=2, bf16)"

    # 3) force the H-tiling fallback path (Case B) with a tiny budget.
    xb3 = jax.random.normal(key, (1, 1, 32, 256), dtype=jnp.float32)
    out3 = jax.block_until_ready(lr_pad(xb3, 1, vmem_budget_bytes=64 * 1024))
    assert jnp.array_equal(out3, lr_pad_ref(xb3, 1)), "mismatch (H-tiled path)"

    # 4) force a partial trailing NC block (cdiv path) with prime NC.
    xb4 = jax.random.normal(key, (1, 7, 16, 16), dtype=jnp.float32)
    out4 = jax.block_until_ready(lr_pad(xb4, 1, vmem_budget_bytes=16 * 1024))
    assert jnp.array_equal(out4, lr_pad_ref(xb4, 1)), "mismatch (partial NC block)"

    # 5) padding = 0 is a no-op.
    assert jnp.array_equal(lr_pad(x, 0), x), "padding=0 must be identity"

    print("KERNEL_OK")
</pallas_src>

<mosaic_0001>
module attributes {stable_mosaic.version = 11 : i64} {
  func.func @_lr_pad_kernel(%arg0: i32, %arg1: memref<8x16x16xf32, #tpu.memory_space<vmem>>, %arg2: memref<8x16x18xf32, #tpu.memory_space<vmem>>) attributes {dimension_semantics = [#tpu.dimension_semantics<parallel>], iteration_bounds = array<i64: 1>, scalar_prefetch = 0 : i64, scratch_operands = 0 : i64, tpu.core_type = #tpu.core_type<tc>, window_params = [{transform_indices = @transform_0, window_bounds = array<i64: 8, 16, 16>}, {transform_indices = @transform_1, window_bounds = array<i64: 8, 16, 18>}]} {
    %c0 = arith.constant 0 : index
    %c0_0 = arith.constant 0 : index
    %c0_1 = arith.constant 0 : index
    %0 = vector.load %arg1[%c0, %c0_0, %c0_1] : memref<8x16x16xf32, #tpu.memory_space<vmem>>, vector<8x16x16xf32>
    %c0_2 = arith.constant 0 : index
    %c0_3 = arith.constant 0 : index
    %c1 = arith.constant 1 : index
    %1 = vector.load %arg2[%c0_2, %c0_3, %c1] : memref<8x16x18xf32, #tpu.memory_space<vmem>>, vector<8x16x16xf32>
    tpu.vector_store %arg2[%c0_2, %c0_3, %c1], %0 {strides = array<i32>} : memref<8x16x18xf32, #tpu.memory_space<vmem>>, vector<8x16x16xf32>,
    %c0_4 = arith.constant 0 : index
    %c0_5 = arith.constant 0 : index
    %c15 = arith.constant 15 : index
    %2 = vector.load %arg1[%c0_4, %c0_5, %c15] : memref<8x16x16xf32, #tpu.memory_space<vmem>>, vector<8x16x1xf32>
    %c0_6 = arith.constant 0 : index
    %c0_7 = arith.constant 0 : index
    %c0_8 = arith.constant 0 : index
    %3 = vector.load %arg2[%c0_6, %c0_7, %c0_8] : memref<8x16x18xf32, #tpu.memory_space<vmem>>, vector<8x16x1xf32>
    tpu.vector_store %arg2[%c0_6, %c0_7, %c0_8], %2 {strides = array<i32>} : memref<8x16x18xf32, #tpu.memory_space<vmem>>, vector<8x16x1xf32>,
    %c0_9 = arith.constant 0 : index
    %c0_10 = arith.constant 0 : index
    %c0_11 = arith.constant 0 : index
    %4 = vector.load %arg1[%c0_9, %c0_10, %c0_11] : memref<8x16x16xf32, #tpu.memory_space<vmem>>, vector<8x16x1xf32>
    %c0_12 = arith.constant 0 : index
    %c0_13 = arith.constant 0 : index
    %c17 = arith.constant 17 : index
    %5 = vector.load %arg2[%c0_12, %c0_13, %c17] : memref<8x16x18xf32, #tpu.memory_space<vmem>>, vector<8x16x1xf32>
    tpu.vector_store %arg2[%c0_12, %c0_13, %c17], %4 {strides = array<i32>} : memref<8x16x18xf32, #tpu.memory_space<vmem>>, vector<8x16x1xf32>,
    return
  }
  func.func @transform_0(%arg0: i32) -> (i32, i32, i32) {
    %c0_i32 = arith.constant 0 : i32
    %c0_i32_0 = arith.constant 0 : i32
    %c0_i32_1 = arith.constant 0 : i32
    return %arg0, %c0_i32, %c0_i32_0 : i32, i32, i32
  }
  func.func @transform_1(%arg0: i32) -> (i32, i32, i32) {
    %c0_i32 = arith.constant 0 : i32
    %c0_i32_0 = arith.constant 0 : i32
    %c0_i32_1 = arith.constant 0 : i32
    return %arg0, %c0_i32, %c0_i32_0 : i32, i32, i32
  }
}

</mosaic_0001>

<llo_original>
// kernel: tpu_custom_call.1
$region0: #{tpu_custom_call.1}
  #allocation0 [shape = 'u32[]', space=smem, size = 0x4, offset = 0x4, fixed_abs, tag = 'smem constant byte address 0x4 - core index']
  #allocation1 [shape = 'u32[144,128]{1,0:T(1,128)}', space=vmem, size = 0x12000, scoped, tag = 'internal scratch']
  %s0 = inlined_call_operand.hbm [shape: f32[8,16,16], index: 0, kind: input, shape index: {}]
  %s1 = inlined_call_operand.hbm [shape: f32[8,16,18], index: 1, kind: output, shape index: {}]
  %s2 = sld [smem:[#allocation0]]
  $region18: #{tpu_custom_call.1} parent=0
    _
  %s4 = ssub.s32 1, %s2
  %s5 = scalar_select 0, %s4, %s2
  $region1: #{tpu_custom_call.1} parent=0
    #allocation2 [shape = 'u8[65536]{0}', space=vmem, size = 0x10000, scoped, tag = 'input window, operand 0, single buffered']
    #allocation3 [shape = 's32[1]{0}', space=sflag, size = 0x4, scoped, tag = 'scoped memory for tpu_custom_call.1']
    #allocation4 [shape = 's32[1]{0}', space=sflag, size = 0x4, scoped, tag = 'scoped memory for tpu_custom_call.1']
    #allocation5 [shape = 'u8[65536]{0}', space=vmem, size = 0x10000, scoped, tag = 'output window, operand 0, single buffered']
    %6 = vsyncpa [#allocation3], 0
    %7 = vsyncpa [#allocation4], 0
    // Predicated region
    $region2: #{tpu_custom_call.1} parent=1 // pred_check
      _
    $region3: #{tpu_custom_call.1} parent=1 // pred_check_branch
      %9 = sbr.rel (0) target = $region5
    $region4: #{tpu_custom_call.1} parent=1 // pred_region
      %s11 = ssub.s32 2048, 2048
      %12 = vsyncadd [#allocation3], %s11
      %s13 = sshll.u32 [#allocation2], 4
      %s14 = int_to_ptr.vmem [resolvable:$true] %s13
      %19 = dma.hbm_to_vmem [thread:$0]  %s0, 2048, %s14, [#allocation3], 128, 128, 8
    $region5: #{tpu_custom_call.1} parent=1 // pred_fallthru
      _
    // Predicated region
    $region6: #{tpu_custom_call.1} parent=1 // pred_check
      _
    $region7: #{tpu_custom_call.1} parent=1 // pred_check_branch
      %21 = sbr.rel (0) target = $region9
    $region8: #{tpu_custom_call.1} parent=1 // pred_region
      %22 = dma.done [#allocation3], 2048
    $region9: #{tpu_custom_call.1} parent=1 // pred_fallthru
      _
    %v23 = vld [vmem:[#allocation2] sm:$0xff]
    %v24 = vld [vmem:[#allocation2 + $0x8] sm:$0xff]
    %v25 = vld [vmem:[#allocation2 + $0x10] sm:$0xff]
    %v26 = vld [vmem:[#allocation2 + $0x18] sm:$0xff]
    %v27 = vld [vmem:[#allocation2 + $0x20] sm:$0xff]
    %v28 = vld [vmem:[#allocation2 + $0x28] sm:$0xff]
    %v29 = vld [vmem:[#allocation2 + $0x30] sm:$0xff]
    %v30 = vld [vmem:[#allocation2 + $0x38] sm:$0xff]
    %v31 = vld [vmem:[#allocation2 + $0x40] sm:$0xff]
    %v32 = vld [vmem:[#allocation2 + $0x48] sm:$0xff]
    %v33 = vld [vmem:[#allocation2 + $0x50] sm:$0xff]
    %v34 = vld [vmem:[#allocation2 + $0x58] sm:$0xff]
    %v35 = vld [vmem:[#allocation2 + $0x60] sm:$0xff]
    %v36 = vld [vmem:[#allocation2 + $0x68] sm:$0xff]
    %v37 = vld [vmem:[#allocation2 + $0x70] sm:$0xff]
    %v38 = vld [vmem:[#allocation2 + $0x78] sm:$0xff]
    %55 = vrot.lane.b32.xlu0 %v23, 1
    %v56 = vpop.permute.xlu0 %55
    %57 = vrot.lane.b32.xlu0 %v24, 1
    %v58 = vpop.permute.xlu0 %57
    %59 = vrot.lane.b32.xlu0 %v25, 1
    %v60 = vpop.permute.xlu0 %59
    %61 = vrot.lane.b32.xlu0 %v26, 1
    %v62 = vpop.permute.xlu0 %61
    %63 = vrot.lane.b32.xlu0 %v27, 1
    %v64 = vpop.permute.xlu0 %63
    %65 = vrot.lane.b32.xlu0 %v28, 1
    %v66 = vpop.permute.xlu0 %65
    %67 = vrot.lane.b32.xlu0 %v29, 1
    %v68 = vpop.permute.xlu0 %67
    %69 = vrot.lane.b32.xlu0 %v30, 1
    %v70 = vpop.permute.xlu0 %69
    %71 = vrot.lane.b32.xlu0 %v31, 1
    %v72 = vpop.permute.xlu0 %71
    %73 = vrot.lane.b32.xlu0 %v32, 1
    %v74 = vpop.permute.xlu0 %73
    %75 = vrot.lane.b32.xlu0 %v33, 1
    %v76 = vpop.permute.xlu0 %75
    %77 = vrot.lane.b32.xlu0 %v34, 1
    %v78 = vpop.permute.xlu0 %77
    %79 = vrot.lane.b32.xlu0 %v35, 1
    %v80 = vpop.permute.xlu0 %79
    %81 = vrot.lane.b32.xlu0 %v36, 1
    %v82 = vpop.permute.xlu0 %81
    %83 = vrot.lane.b32.xlu0 %v37, 1
    %v84 = vpop.permute.xlu0 %83
    %85 = vrot.lane.b32.xlu0 %v38, 1
    %v86 = vpop.permute.xlu0 %85
    %vm103 = vcmask 138248
    %104 = vst.msk [vmem:[#allocation5] sm:$0xff] %vm103, %v56
    %105 = vst.msk [vmem:[#allocation5 + $0x8] sm:$0xff] %vm103, %v58
    %106 = vst.msk [vmem:[#allocation5 + $0x10] sm:$0xff] %vm103, %v60
    %107 = vst.msk [vmem:[#allocation5 + $0x18] sm:$0xff] %vm103, %v62
    %108 = vst.msk [vmem:[#allocation5 + $0x20] sm:$0xff] %vm103, %v64
    %109 = vst.msk [vmem:[#allocation5 + $0x28] sm:$0xff] %vm103, %v66
    %110 = vst.msk [vmem:[#allocation5 + $0x30] sm:$0xff] %vm103, %v68
    %111 = vst.msk [vmem:[#allocation5 + $0x38] sm:$0xff] %vm103, %v70
    %112 = vst.msk [vmem:[#allocation5 + $0x40] sm:$0xff] %vm103, %v72
    %113 = vst.msk [vmem:[#allocation5 + $0x48] sm:$0xff] %vm103, %v74
    %114 = vst.msk [vmem:[#allocation5 + $0x50] sm:$0xff] %vm103, %v76
    %115 = vst.msk [vmem:[#allocation5 + $0x58] sm:$0xff] %vm103, %v78
    %116 = vst.msk [vmem:[#allocation5 + $0x60] sm:$0xff] %vm103, %v80
    %117 = vst.msk [vmem:[#allocation5 + $0x68] sm:$0xff] %vm103, %v82
    %118 = vst.msk [vmem:[#allocation5 + $0x70] sm:$0xff] %vm103, %v84
    %119 = vst.msk [vmem:[#allocation5 + $0x78] sm:$0xff] %vm103, %v86
    %v120 = vld [vmem:[#allocation2] sm:$0xff]
    %v121 = vld [vmem:[#allocation2 + $0x8] sm:$0xff]
    %v122 = vld [vmem:[#allocation2 + $0x10] sm:$0xff]
    %v123 = vld [vmem:[#allocation2 + $0x18] sm:$0xff]
    %v124 = vld [vmem:[#allocation2 + $0x20] sm:$0xff]
    %v125 = vld [vmem:[#allocation2 + $0x28] sm:$0xff]
    %v126 = vld [vmem:[#allocation2 + $0x30] sm:$0xff]
    %v127 = vld [vmem:[#allocation2 + $0x38] sm:$0xff]
    %v128 = vld [vmem:[#allocation2 + $0x40] sm:$0xff]
    %v129 = vld [vmem:[#allocation2 + $0x48] sm:$0xff]
    %v130 = vld [vmem:[#allocation2 + $0x50] sm:$0xff]
    %v131 = vld [vmem:[#allocation2 + $0x58] sm:$0xff]
    %v132 = vld [vmem:[#allocation2 + $0x60] sm:$0xff]
    %v133 = vld [vmem:[#allocation2 + $0x68] sm:$0xff]
    %v134 = vld [vmem:[#allocation2 + $0x70] sm:$0xff]
    %v135 = vld [vmem:[#allocation2 + $0x78] sm:$0xff]
    %152 = vrot.lane.b32.xlu0 %v120, 113
    %v153 = vpop.permute.xlu0 %152
    %154 = vrot.lane.b32.xlu0 %v121, 113
    %v155 = vpop.permute.xlu0 %154
    %156 = vrot.lane.b32.xlu0 %v122, 113
    %v157 = vpop.permute.xlu0 %156
    %158 = vrot.lane.b32.xlu0 %v123, 113
    %v159 = vpop.permute.xlu0 %158
    %160 = vrot.lane.b32.xlu0 %v124, 113
    %v161 = vpop.permute.xlu0 %160
    %162 = vrot.lane.b32.xlu0 %v125, 113
    %v163 = vpop.permute.xlu0 %162
    %164 = vrot.lane.b32.xlu0 %v126, 113
    %v165 = vpop.permute.xlu0 %164
    %166 = vrot.lane.b32.xlu0 %v127, 113
    %v167 = vpop.permute.xlu0 %166
    %168 = vrot.lane.b32.xlu0 %v128, 113
    %v169 = vpop.permute.xlu0 %168
    %170 = vrot.lane.b32.xlu0 %v129, 113
    %v171 = vpop.permute.xlu0 %170
    %172 = vrot.lane.b32.xlu0 %v130, 113
    %v173 = vpop.permute.xlu0 %172
    %174 = vrot.lane.b32.xlu0 %v131, 113
    %v175 = vpop.permute.xlu0 %174
    %176 = vrot.lane.b32.xlu0 %v132, 113
    %v177 = vpop.permute.xlu0 %176
    %178 = vrot.lane.b32.xlu0 %v133, 113
    %v179 = vpop.permute.xlu0 %178
    %180 = vrot.lane.b32.xlu0 %v134, 113
    %v181 = vpop.permute.xlu0 %180
    %182 = vrot.lane.b32.xlu0 %v135, 113
    %v183 = vpop.permute.xlu0 %182
    %vm200 = vcmask 7168
    %201 = vst.msk [vmem:[#allocation5] sm:$0xff] %vm200, %v153
    %202 = vst.msk [vmem:[#allocation5 + $0x8] sm:$0xff] %vm200, %v155
    %203 = vst.msk [vmem:[#allocation5 + $0x10] sm:$0xff] %vm200, %v157
    %204 = vst.msk [vmem:[#allocation5 + $0x18] sm:$0xff] %vm200, %v159
    %205 = vst.msk [vmem:[#allocation5 + $0x20] sm:$0xff] %vm200, %v161
    %206 = vst.msk [vmem:[#allocation5 + $0x28] sm:$0xff] %vm200, %v163
    %207 = vst.msk [vmem:[#allocation5 + $0x30] sm:$0xff] %vm200, %v165
    %208 = vst.msk [vmem:[#allocation5 + $0x38] sm:$0xff] %vm200, %v167
    %209 = vst.msk [vmem:[#allocation5 + $0x40] sm:$0xff] %vm200, %v169
    %210 = vst.msk [vmem:[#allocation5 + $0x48] sm:$0xff] %vm200, %v171
    %211 = vst.msk [vmem:[#allocation5 + $0x50] sm:$0xff] %vm200, %v173
    %212 = vst.msk [vmem:[#allocation5 + $0x58] sm:$0xff] %vm200, %v175
    %213 = vst.msk [vmem:[#allocation5 + $0x60] sm:$0xff] %vm200, %v177
    %214 = vst.msk [vmem:[#allocation5 + $0x68] sm:$0xff] %vm200, %v179
    %215 = vst.msk [vmem:[#allocation5 + $0x70] sm:$0xff] %vm200, %v181
    %216 = vst.msk [vmem:[#allocation5 + $0x78] sm:$0xff] %vm200, %v183
    %v217 = vld [vmem:[#allocation2] sm:$0xff]
    %v218 = vld [vmem:[#allocation2 + $0x8] sm:$0xff]
    %v219 = vld [vmem:[#allocation2 + $0x10] sm:$0xff]
    %v220 = vld [vmem:[#allocation2 + $0x18] sm:$0xff]
    %v221 = vld [vmem:[#allocation2 + $0x20] sm:$0xff]
    %v222 = vld [vmem:[#allocation2 + $0x28] sm:$0xff]
    %v223 = vld [vmem:[#allocation2 + $0x30] sm:$0xff]
    %v224 = vld [vmem:[#allocation2 + $0x38] sm:$0xff]
    %v225 = vld [vmem:[#allocation2 + $0x40] sm:$0xff]
    %v226 = vld [vmem:[#allocation2 + $0x48] sm:$0xff]
    %v227 = vld [vmem:[#allocation2 + $0x50] sm:$0xff]
    %v228 = vld [vmem:[#allocation2 + $0x58] sm:$0xff]
    %v229 = vld [vmem:[#allocation2 + $0x60] sm:$0xff]
    %v230 = vld [vmem:[#allocation2 + $0x68] sm:$0xff]
    %v231 = vld [vmem:[#allocation2 + $0x70] sm:$0xff]
    %v232 = vld [vmem:[#allocation2 + $0x78] sm:$0xff]
    %249 = vrot.lane.b32.xlu0 %v217, 17
    %v250 = vpop.permute.xlu0 %249
    %251 = vrot.lane.b32.xlu0 %v218, 17
    %v252 = vpop.permute.xlu0 %251
    %253 = vrot.lane.b32.xlu0 %v219, 17
    %v254 = vpop.permute.xlu0 %253
    %255 = vrot.lane.b32.xlu0 %v220, 17
    %v256 = vpop.permute.xlu0 %255
    %257 = vrot.lane.b32.xlu0 %v221, 17
    %v258 = vpop.permute.xlu0 %257
    %259 = vrot.lane.b32.xlu0 %v222, 17
    %v260 = vpop.permute.xlu0 %259
    %261 = vrot.lane.b32.xlu0 %v223, 17
    %v262 = vpop.permute.xlu0 %261
    %263 = vrot.lane.b32.xlu0 %v224, 17
    %v264 = vpop.permute.xlu0 %263
    %265 = vrot.lane.b32.xlu0 %v225, 17
    %v266 = vpop.permute.xlu0 %265
    %267 = vrot.lane.b32.xlu0 %v226, 17
    %v268 = vpop.permute.xlu0 %267
    %269 = vrot.lane.b32.xlu0 %v227, 17
    %v270 = vpop.permute.xlu0 %269
    %271 = vrot.lane.b32.xlu0 %v228, 17
    %v272 = vpop.permute.xlu0 %271
    %273 = vrot.lane.b32.xlu0 %v229, 17
    %v274 = vpop.permute.xlu0 %273
    %275 = vrot.lane.b32.xlu0 %v230, 17
    %v276 = vpop.permute.xlu0 %275
    %277 = vrot.lane.b32.xlu0 %v231, 17
    %v278 = vpop.permute.xlu0 %277
    %279 = vrot.lane.b32.xlu0 %v232, 17
    %v280 = vpop.permute.xlu0 %279
    %vm297 = vcmask 146568
    %298 = vst.msk [vmem:[#allocation5] sm:$0xff] %vm297, %v250
    %299 = vst.msk [vmem:[#allocation5 + $0x8] sm:$0xff] %vm297, %v252
    %300 = vst.msk [vmem:[#allocation5 + $0x10] sm:$0xff] %vm297, %v254
    %301 = vst.msk [vmem:[#allocation5 + $0x18] sm:$0xff] %vm297, %v256
    %302 = vst.msk [vmem:[#allocation5 + $0x20] sm:$0xff] %vm297, %v258
    %303 = vst.msk [vmem:[#allocation5 + $0x28] sm:$0xff] %vm297, %v260
    %304 = vst.msk [vmem:[#allocation5 + $0x30] sm:$0xff] %vm297, %v262
    %305 = vst.msk [vmem:[#allocation5 + $0x38] sm:$0xff] %vm297, %v264
    %306 = vst.msk [vmem:[#allocation5 + $0x40] sm:$0xff] %vm297, %v266
    %307 = vst.msk [vmem:[#allocation5 + $0x48] sm:$0xff] %vm297, %v268
    %308 = vst.msk [vmem:[#allocation5 + $0x50] sm:$0xff] %vm297, %v270
    %309 = vst.msk [vmem:[#allocation5 + $0x58] sm:$0xff] %vm297, %v272
    %310 = vst.msk [vmem:[#allocation5 + $0x60] sm:$0xff] %vm297, %v274
    %311 = vst.msk [vmem:[#allocation5 + $0x68] sm:$0xff] %vm297, %v276
    %312 = vst.msk [vmem:[#allocation5 + $0x70] sm:$0xff] %vm297, %v278
    %313 = vst.msk [vmem:[#allocation5 + $0x78] sm:$0xff] %vm297, %v280
    // Predicated region
    $region10: #{tpu_custom_call.1} parent=1 // pred_check
      _
    $region11: #{tpu_custom_call.1} parent=1 // pred_check_branch
      %315 = sbr.rel (0) target = $region13
    $region12: #{tpu_custom_call.1} parent=1 // pred_region
      %s317 = ssub.s32 2048, 2048
      %318 = vsyncadd [#allocation4], %s317
      %s319 = sshll.u32 [#allocation5], 4
      %s320 = int_to_ptr.vmem [resolvable:$true] %s319
      %325 = dma.vmem_to_hbm [thread:$0]  %s320, 2048, %s1, [#allocation4], 128, 128, 8
    $region13: #{tpu_custom_call.1} parent=1 // pred_fallthru
      _
    // Predicated region
    $region14: #{tpu_custom_call.1} parent=1 // pred_check
      _
    $region15: #{tpu_custom_call.1} parent=1 // pred_check_branch
      %327 = sbr.rel (0) target = $region17
    $region16: #{tpu_custom_call.1} parent=1 // pred_region
      %328 = dma.done [#allocation4], 2048
    $region17: #{tpu_custom_call.1} parent=1 // pred_fallthru
      _
    %329 = vsyncpa [#allocation3], 1
    %330 = vsyncpa [#allocation4], 1

</llo_original>
